<compile_context>
chip_gen: v5e
topology: v5e:2x2
jax: 0.10.0
libtpu: 0.0.40
codegen_flags: <defaults>
</compile_context>

<pallas_src>
import functools

import jax
import jax.numpy as jnp
from jax.experimental import pallas as pl
from jax.experimental.pallas import tpu as pltpu


_PACK = 4            # logical rows packed per packed row -> out lanes = 64*4 = 256
_MIN_TILES = 4       # keep >=4 grid steps when possible (megacore + pipelining)


def _chip_defaults():
    """(max packed rows per tile, vmem_limit_bytes or None) per TPU generation."""
    kind = ""
    try:
        kind = jax.devices()[0].device_kind.lower()
    except Exception:
        pass
    if "v7" in kind:
        # 64 MiB physical VMEM / TC, 3.2 TB/s HBM: big steps, raised scoped limit.
        return 8192, 48 * 1024 * 1024
    if "v5 lite" in kind or "v5e" in kind or "v5litepod" in kind:
        # 16 MiB default scoped VMEM: tm=2048 -> ~10 MiB live, fits without a raise.
        return 2048, None
    # v6e / v5p / unknown: tm=4096 -> ~20 MiB live, fits the 32 MiB default.
    return 4096, None


_TM_MAX, _VMEM_LIMIT = _chip_defaults()


def _mlp_kernel(x_ref, w0_ref, b0_ref, w1_ref, b1_ref, o_ref):
    # x_ref: (tm, F*P)   w0_ref: (F*P, H*P)  b0_ref: (1, H*P)
    # w1_ref: (H*P, E*P) b1_ref: (1, E*P)    o_ref: (tm, E*P)
    x = x_ref[...]
    h = jnp.dot(x, w0_ref[...], preferred_element_type=jnp.float32) + b0_ref[...]
    h = jnp.maximum(h, 0.0)                       # ReLU
    out = jnp.dot(h, w1_ref[...], preferred_element_type=jnp.float32) + b1_ref[...]
    o_ref[...] = out.astype(o_ref.dtype)


def _block_diag(w, p):
    """Block-diagonal stack of p copies of w: (in_d, out_d) -> (p*in_d, p*out_d)."""
    in_d, out_d = w.shape
    eye = jnp.eye(p, dtype=w.dtype)
    return (eye[:, None, :, None] * w[None, :, None, :]).reshape(p * in_d, p * out_d)


def _cdiv(a, b):
    return (a + b - 1) // b


def _round_up(x, m):
    return _cdiv(x, m) * m


@functools.partial(jax.jit, static_argnames=("embed_dim",))
def set_vector_embedder(x, w0, b0, w1, b1, *, embed_dim):
    """x: (B, S, F) float32 -> (B, S, embed_dim) float32.

    Weights are (in_dim, out_dim) (transposed vs. nn.Linear); biases are (1, out_dim).
    """
    B, S, F = x.shape
    H = w0.shape[1]
    E = embed_dim
    M = B * S
    P = _PACK

    # ---- adaptive row tiling (all shape math is static under jit) ----
    Mp = _cdiv(M, P)                              # packed rows needed
    n_tiles = max(1, _cdiv(Mp, _TM_MAX))
    if Mp >= _MIN_TILES * 8:                      # enough work for >=4 real steps
        n_tiles = max(n_tiles, _MIN_TILES)
    tm = _round_up(_cdiv(Mp, n_tiles), 8)         # packed rows per tile (mult. of 8)
    Mp_pad = _round_up(Mp, tm)                    # padding bounded to < 8*n_tiles rows
    M_pad = Mp_pad * P
    grid = (Mp_pad // tm,)

    x2d = x.reshape(M, F)
    if M_pad != M:                                # skip the copy in the aligned case
        x2d = jnp.pad(x2d, ((0, M_pad - M), (0, 0)))
    xp = x2d.reshape(Mp_pad, F * P)               # contiguous view: P rows side by side

    # block-diagonal weights so the packed matmul computes P independent rows
    w0w = _block_diag(w0, P)                      # (F*P, H*P)
    b0w = jnp.tile(b0.reshape(1, H), (1, P))      # (1, H*P)
    w1w = _block_diag(w1, P)                      # (H*P, E*P)
    b1w = jnp.tile(b1.reshape(1, E), (1, P))      # (1, E*P)

    # Advisory cost: actual MXU flops (block-diag included) and actual HBM bytes.
    cost = pl.CostEstimate(
        flops=2 * Mp_pad * ((F * P) * (H * P) + (H * P) * (E * P)),
        transcendentals=0,
        bytes_accessed=4 * (Mp_pad * F * P + Mp_pad * E * P
                            + w0w.size + b0w.size + w1w.size + b1w.size),
    )

    outp = pl.pallas_call(
        _mlp_kernel,
        out_shape=jax.ShapeDtypeStruct((Mp_pad, E * P), x.dtype),
        grid_spec=pltpu.PrefetchScalarGridSpec(
            num_scalar_prefetch=0,
            grid=grid,
            in_specs=[
                pl.BlockSpec((tm, F * P), lambda i: (i, 0)),   # x tile, pipelined
                pl.BlockSpec(w0w.shape, lambda i: (0, 0)),     # weights resident
                pl.BlockSpec(b0w.shape, lambda i: (0, 0)),
                pl.BlockSpec(w1w.shape, lambda i: (0, 0)),
                pl.BlockSpec(b1w.shape, lambda i: (0, 0)),
            ],
            out_specs=pl.BlockSpec((tm, E * P), lambda i: (i, 0)),
        ),
        compiler_params=pltpu.CompilerParams(
            dimension_semantics=("parallel",),     # shard tiles across v7x's 2 TCs
            vmem_limit_bytes=_VMEM_LIMIT),
        cost_estimate=cost,
    )(xp, w0w, b0w, w1w, b1w)

    out2d = outp.reshape(M_pad, E)                # unpack the P-row packing
    if M_pad != M:
        out2d = out2d[:M]                         # drop padded rows (only if padded)
    return out2d.reshape(B, S, E)


def _reference(x, w0, b0, w1, b1):
    h = jnp.maximum(x @ w0 + b0[0], 0.0)
    return h @ w1 + b1[0]


if __name__ == "__main__":
    # Small shapes consistent with the module: a "set" of 8 vectors of 4
    # features each, batch of 2.
    B, S = 2, 8
    n_features, hidden, embed_dim = 4, 32, 64

    key = jax.random.PRNGKey(0)
    kx, k0, kb0, k1, kb1 = jax.random.split(key, 5)

    x = jax.random.normal(kx, (B, S, n_features), dtype=jnp.float32)

    # Deterministic synthetic parameters (uniform, Linear-style scale).
    lim0 = 1.0 / jnp.sqrt(n_features)
    w0 = jax.random.uniform(k0, (n_features, hidden), jnp.float32, -lim0, lim0)
    b0 = jax.random.uniform(kb0, (1, hidden), jnp.float32, -lim0, lim0)
    lim1 = 1.0 / jnp.sqrt(hidden)
    w1 = jax.random.uniform(k1, (hidden, embed_dim), jnp.float32, -lim1, lim1)
    b1 = jax.random.uniform(kb1, (1, embed_dim), jnp.float32, -lim1, lim1)

    out = set_vector_embedder(x, w0, b0, w1, b1, embed_dim=embed_dim)
    out = jax.block_until_ready(out)

    ref = _reference(x.reshape(-1, n_features), w0, b0, w1, b1).reshape(
        B, S, embed_dim)

    assert out.shape == (B, S, embed_dim), out.shape
    assert jnp.allclose(out, ref, atol=1e-5, rtol=1e-5), (
        float(jnp.max(jnp.abs(out - ref))))

    print("KERNEL_OK")
</pallas_src>

<mosaic_0001>
module attributes {stable_mosaic.version = 11 : i64} {
  func.func @_mlp_kernel(%arg0: i32, %arg1: memref<8x16xf32, #tpu.memory_space<vmem>>, %arg2: memref<16x128xf32, #tpu.memory_space<vmem>>, %arg3: memref<1x128xf32, #tpu.memory_space<vmem>>, %arg4: memref<128x256xf32, #tpu.memory_space<vmem>>, %arg5: memref<1x256xf32, #tpu.memory_space<vmem>>, %arg6: memref<8x256xf32, #tpu.memory_space<vmem>>) attributes {dimension_semantics = [#tpu.dimension_semantics<parallel>], iteration_bounds = array<i64: 1>, scalar_prefetch = 0 : i64, scratch_operands = 0 : i64, tpu.core_type = #tpu.core_type<tc>, window_params = [{transform_indices = @transform_0, window_bounds = array<i64: 8, 16>}, {pipeline_mode = #tpu.pipeline_mode<synchronous>, transform_indices = @transform_1, window_bounds = array<i64: 16, 128>}, {pipeline_mode = #tpu.pipeline_mode<synchronous>, transform_indices = @transform_2, window_bounds = array<i64: 1, 128>}, {pipeline_mode = #tpu.pipeline_mode<synchronous>, transform_indices = @transform_3, window_bounds = array<i64: 128, 256>}, {pipeline_mode = #tpu.pipeline_mode<synchronous>, transform_indices = @transform_4, window_bounds = array<i64: 1, 256>}, {transform_indices = @transform_5, window_bounds = array<i64: 8, 256>}]} {
    %c0 = arith.constant 0 : index
    %c0_0 = arith.constant 0 : index
    %0 = vector.load %arg1[%c0, %c0_0] : memref<8x16xf32, #tpu.memory_space<vmem>>, vector<8x16xf32>
    %c0_1 = arith.constant 0 : index
    %c0_2 = arith.constant 0 : index
    %1 = vector.load %arg2[%c0_1, %c0_2] : memref<16x128xf32, #tpu.memory_space<vmem>>, vector<16x128xf32>
    %cst = arith.constant dense<0.000000e+00> : vector<8x128xf32>
    %2 = tpu.matmul %0, %1, %cst {dimension_numbers = #tpu.dot_dimension_numbers<[1], [0], [0], [1], [0, 0, 1, 1], [], []>} : vector<8x16xf32>, vector<16x128xf32>, vector<8x128xf32> -> vector<8x128xf32>
    %c0_3 = arith.constant 0 : index
    %c0_4 = arith.constant 0 : index
    %3 = vector.load %arg3[%c0_3, %c0_4] : memref<1x128xf32, #tpu.memory_space<vmem>>, vector<1x128xf32>
    %4 = vector.broadcast %3 : vector<1x128xf32> to vector<8x128xf32>
    %5 = arith.addf %2, %4 : vector<8x128xf32>
    %cst_5 = arith.constant 0.000000e+00 : f32
    %6 = vector.broadcast %cst_5 : f32 to vector<8x128xf32>
    %7 = arith.maximumf %5, %6 : vector<8x128xf32>
    %c0_6 = arith.constant 0 : index
    %c0_7 = arith.constant 0 : index
    %8 = vector.load %arg4[%c0_6, %c0_7] : memref<128x256xf32, #tpu.memory_space<vmem>>, vector<128x256xf32>
    %cst_8 = arith.constant dense<0.000000e+00> : vector<8x256xf32>
    %9 = tpu.matmul %7, %8, %cst_8 {dimension_numbers = #tpu.dot_dimension_numbers<[1], [0], [0], [1], [0, 0, 1, 1], [], []>} : vector<8x128xf32>, vector<128x256xf32>, vector<8x256xf32> -> vector<8x256xf32>
    %c0_9 = arith.constant 0 : index
    %c0_10 = arith.constant 0 : index
    %10 = vector.load %arg5[%c0_9, %c0_10] : memref<1x256xf32, #tpu.memory_space<vmem>>, vector<1x256xf32>
    %11 = vector.broadcast %10 : vector<1x256xf32> to vector<8x256xf32>
    %12 = arith.addf %9, %11 : vector<8x256xf32>
    %c0_11 = arith.constant 0 : index
    %c0_12 = arith.constant 0 : index
    %13 = vector.load %arg6[%c0_11, %c0_12] : memref<8x256xf32, #tpu.memory_space<vmem>>, vector<8x256xf32>
    tpu.vector_store %arg6[%c0_11, %c0_12], %12 {strides = array<i32>} : memref<8x256xf32, #tpu.memory_space<vmem>>, vector<8x256xf32>,
    return
  }
  func.func @transform_0(%arg0: i32) -> (i32, i32) {
    %c0_i32 = arith.constant 0 : i32
    %c0_i32_0 = arith.constant 0 : i32
    return %arg0, %c0_i32 : i32, i32
  }
  func.func @transform_1(%arg0: i32) -> (i32, i32) {
    %c0_i32 = arith.constant 0 : i32
    %c0_i32_0 = arith.constant 0 : i32
    %c0_i32_1 = arith.constant 0 : i32
    return %c0_i32, %c0_i32_0 : i32, i32
  }
  func.func @transform_2(%arg0: i32) -> (i32, i32) {
    %c0_i32 = arith.constant 0 : i32
    %c0_i32_0 = arith.constant 0 : i32
    %c0_i32_1 = arith.constant 0 : i32
    return %c0_i32, %c0_i32_0 : i32, i32
  }
  func.func @transform_3(%arg0: i32) -> (i32, i32) {
    %c0_i32 = arith.constant 0 : i32
    %c0_i32_0 = arith.constant 0 : i32
    %c0_i32_1 = arith.constant 0 : i32
    return %c0_i32, %c0_i32_0 : i32, i32
  }
  func.func @transform_4(%arg0: i32) -> (i32, i32) {
    %c0_i32 = arith.constant 0 : i32
    %c0_i32_0 = arith.constant 0 : i32
    %c0_i32_1 = arith.constant 0 : i32
    return %c0_i32, %c0_i32_0 : i32, i32
  }
  func.func @transform_5(%arg0: i32) -> (i32, i32) {
    %c0_i32 = arith.constant 0 : i32
    %c0_i32_0 = arith.constant 0 : i32
    return %arg0, %c0_i32 : i32, i32
  }
}

</mosaic_0001>

<llo_original>
// kernel: set_vector_embedder.1
$region0: #{set_vector_embedder.1}
  #allocation0 [shape = 'u32[]', space=smem, size = 0x4, offset = 0x4, fixed_abs, tag = 'smem constant byte address 0x4 - core index']
  #allocation1 [shape = 'u32[72,128]{1,0:T(1,128)}', space=vmem, size = 0x9000, scoped, tag = 'internal scratch']
  %s0 = inlined_call_operand.vmem [shape: f32[8,16], index: 0, kind: input, shape index: {}]
  %s1 = inlined_call_operand.vmem [shape: f32[16,128], index: 1, kind: input, shape index: {}]
  %s2 = inlined_call_operand.vmem [shape: f32[1,128], index: 2, kind: input, shape index: {}]
  %s3 = inlined_call_operand.vmem [shape: f32[128,256], index: 3, kind: input, shape index: {}]
  %s4 = inlined_call_operand.vmem [shape: f32[1,256], index: 4, kind: input, shape index: {}]
  %s5 = inlined_call_operand.vmem [shape: f32[8,256], index: 5, kind: output, shape index: {}]
  %s6 = sld [smem:[#allocation0]]
  $region30: #{set_vector_embedder.1} parent=0
    _
  %s8 = ssub.s32 1, %s6
  %s9 = scalar_select 0, %s8, %s6
  // Predicated region
  $region2: #{set_vector_embedder.1} parent=0 // pred_check
    _
  $region3: #{set_vector_embedder.1} parent=0 // pred_check_branch
    %11 = sbr.rel (0) target = $region5
  $region4: #{set_vector_embedder.1} parent=0 // pred_region
    _
  $region5: #{set_vector_embedder.1} parent=0 // pred_fallthru
    _
  // Predicated region
  $region6: #{set_vector_embedder.1} parent=0 // pred_check
    _
  $region7: #{set_vector_embedder.1} parent=0 // pred_check_branch
    %13 = sbr.rel (0) target = $region9
  $region8: #{set_vector_embedder.1} parent=0 // pred_region
    _
  $region9: #{set_vector_embedder.1} parent=0 // pred_fallthru
    _
  // Predicated region
  $region10: #{set_vector_embedder.1} parent=0 // pred_check
    _
  $region11: #{set_vector_embedder.1} parent=0 // pred_check_branch
    %15 = sbr.rel (0) target = $region13
  $region12: #{set_vector_embedder.1} parent=0 // pred_region
    _
  $region13: #{set_vector_embedder.1} parent=0 // pred_fallthru
    _
  // Predicated region
  $region14: #{set_vector_embedder.1} parent=0 // pred_check
    _
  $region15: #{set_vector_embedder.1} parent=0 // pred_check_branch
    %17 = sbr.rel (0) target = $region17
  $region16: #{set_vector_embedder.1} parent=0 // pred_region
    _
  $region17: #{set_vector_embedder.1} parent=0 // pred_fallthru
    _
  // Predicated region
  $region18: #{set_vector_embedder.1} parent=0 // pred_check
    _
  $region19: #{set_vector_embedder.1} parent=0 // pred_check_branch
    %19 = sbr.rel (0) target = $region21
  $region20: #{set_vector_embedder.1} parent=0 // pred_region
    _
  $region21: #{set_vector_embedder.1} parent=0 // pred_fallthru
    _
  %v20 = vld [vmem:[%s0] sm:$0xff]
  %v21 = vld [vmem:[%s1] sm:$0xff]
  %v22 = vld [vmem:[%s1 + $0x8] sm:$0xff]
  %v23 = vld [vmem:[%s2] sm:$0x1]
  %v25 = vperm.slane %v23, 0
  %vm27 = vcmask 130048
  %v29 = vsel %vm27, %v20, 0
  %31 = vmatpush.msra.mxu0 0.0
  %32 = vmatpush.msra.mxu0 0.0
  %33 = vmatpush.msra.mxu0 0.0
  %34 = vmatpush.msra.mxu0 0.0
  %35 = vmatpush.msra.mxu0 0.0
  %36 = vmatpush.msra.mxu0 0.0
  %37 = vmatpush.msra.mxu0 0.0
  %38 = vmatpush.msra.mxu0 0.0
  %39 = vmatpush.msra.mxu0 0.0
  %40 = vmatpush.msra.mxu0 0.0
  %41 = vmatpush.msra.mxu0 0.0
  %42 = vmatpush.msra.mxu0 0.0
  %43 = vmatpush.msra.mxu0 0.0
  %44 = vmatpush.msra.mxu0 0.0
  %45 = vmatpush.msra.mxu0 %v22
  %46 = vmatpush.msra.mxu0 %v21
  %47 = vmatmul.f32.gmra.mxu0 %v29
  %v48 = vpop.f32.mrf.mxu0
  %v49 = vadd.f32 %v25, %v48
  %50 = vdwg.mxu0
  %v51 = vmax.f32 %v49, 0.0
  %v52 = vld [vmem:[%s3] sm:$0xff]
  %v53 = vld [vmem:[%s3 + $0x8] sm:$0xff]
  %v54 = vld [vmem:[%s3 + $0x10] sm:$0xff]
  %v55 = vld [vmem:[%s3 + $0x18] sm:$0xff]
  %v56 = vld [vmem:[%s3 + $0x20] sm:$0xff]
  %v57 = vld [vmem:[%s3 + $0x28] sm:$0xff]
  %v58 = vld [vmem:[%s3 + $0x30] sm:$0xff]
  %v59 = vld [vmem:[%s3 + $0x38] sm:$0xff]
  %v60 = vld [vmem:[%s3 + $0x40] sm:$0xff]
  %v61 = vld [vmem:[%s3 + $0x48] sm:$0xff]
  %v62 = vld [vmem:[%s3 + $0x50] sm:$0xff]
  %v63 = vld [vmem:[%s3 + $0x58] sm:$0xff]
  %v64 = vld [vmem:[%s3 + $0x60] sm:$0xff]
  %v65 = vld [vmem:[%s3 + $0x68] sm:$0xff]
  %v66 = vld [vmem:[%s3 + $0x70] sm:$0xff]
  %v67 = vld [vmem:[%s3 + $0x78] sm:$0xff]
  %v68 = vld [vmem:[%s3 + $0x80] sm:$0xff]
  %v69 = vld [vmem:[%s3 + $0x88] sm:$0xff]
  %v70 = vld [vmem:[%s3 + $0x90] sm:$0xff]
  %v71 = vld [vmem:[%s3 + $0x98] sm:$0xff]
  %v72 = vld [vmem:[%s3 + $0xa0] sm:$0xff]
  %v73 = vld [vmem:[%s3 + $0xa8] sm:$0xff]
  %v74 = vld [vmem:[%s3 + $0xb0] sm:$0xff]
  %v75 = vld [vmem:[%s3 + $0xb8] sm:$0xff]
  %v76 = vld [vmem:[%s3 + $0xc0] sm:$0xff]
  %v77 = vld [vmem:[%s3 + $0xc8] sm:$0xff]
  %v78 = vld [vmem:[%s3 + $0xd0] sm:$0xff]
  %v79 = vld [vmem:[%s3 + $0xd8] sm:$0xff]
  %v80 = vld [vmem:[%s3 + $0xe0] sm:$0xff]
  %v81 = vld [vmem:[%s3 + $0xe8] sm:$0xff]
  %v82 = vld [vmem:[%s3 + $0xf0] sm:$0xff]
  %v83 = vld [vmem:[%s3 + $0xf8] sm:$0xff]
  %v84 = vld [vmem:[%s4] sm:$0x3]
  %v86 = vperm.slane %v84, 0
  %v87 = vperm.slane %v84, 1
  %90 = vmatpush.msra.mxu0 %v82
  %91 = vmatpush.msra.mxu0 %v80
  %92 = vmatpush.msra.mxu0 %v78
  %93 = vmatpush.msra.mxu0 %v76
  %94 = vmatpush.msra.mxu0 %v74
  %95 = vmatpush.msra.mxu0 %v72
  %96 = vmatpush.msra.mxu0 %v70
  %97 = vmatpush.msra.mxu0 %v68
  %98 = vmatpush.msra.mxu0 %v66
  %99 = vmatpush.msra.mxu0 %v64
  %100 = vmatpush.msra.mxu0 %v62
  %101 = vmatpush.msra.mxu0 %v60
  %102 = vmatpush.msra.mxu0 %v58
  %103 = vmatpush.msra.mxu0 %v56
  %104 = vmatpush.msra.mxu0 %v54
  %105 = vmatpush.msra.mxu0 %v52
  %106 = vmatmul.f32.gmra.mxu0 %v51
  %v107 = vpop.f32.mrf.mxu0
  %v108 = vadd.f32 %v86, %v107
  %109 = vdwg.mxu0
  %110 = vmatpush.msra.mxu0 %v83
  %111 = vmatpush.msra.mxu0 %v81
  %112 = vmatpush.msra.mxu0 %v79
  %113 = vmatpush.msra.mxu0 %v77
  %114 = vmatpush.msra.mxu0 %v75
  %115 = vmatpush.msra.mxu0 %v73
  %116 = vmatpush.msra.mxu0 %v71
  %117 = vmatpush.msra.mxu0 %v69
  %118 = vmatpush.msra.mxu0 %v67
  %119 = vmatpush.msra.mxu0 %v65
  %120 = vmatpush.msra.mxu0 %v63
  %121 = vmatpush.msra.mxu0 %v61
  %122 = vmatpush.msra.mxu0 %v59
  %123 = vmatpush.msra.mxu0 %v57
  %124 = vmatpush.msra.mxu0 %v55
  %125 = vmatpush.msra.mxu0 %v53
  %126 = vmatmul.f32.gmra.mxu0 %v51
  %v127 = vpop.f32.mrf.mxu0
  %v128 = vadd.f32 %v87, %v127
  %129 = vdwg.mxu0
  %130 = vst [vmem:[%s5] sm:$0xff] %v108
  %131 = vst [vmem:[%s5 + $0x8] sm:$0xff] %v128
  // Predicated region
  $region22: #{set_vector_embedder.1} parent=0 // pred_check
    _
  $region23: #{set_vector_embedder.1} parent=0 // pred_check_branch
    %133 = sbr.rel (0) target = $region25
  $region24: #{set_vector_embedder.1} parent=0 // pred_region
    _
  $region25: #{set_vector_embedder.1} parent=0 // pred_fallthru
    _
  // Predicated region
  $region26: #{set_vector_embedder.1} parent=0 // pred_check
    _
  $region27: #{set_vector_embedder.1} parent=0 // pred_check_branch
    %135 = sbr.rel (0) target = $region29
  $region28: #{set_vector_embedder.1} parent=0 // pred_region
    _
  $region29: #{set_vector_embedder.1} parent=0 // pred_fallthru
    _

</llo_original>
